<compile_context>
chip_gen: v7x
topology: tpu7x:2x2x1
jax: 0.10.0
libtpu: 0.0.40
codegen_flags: <defaults>
</compile_context>

<pallas_src>
import functools

import jax
import jax.numpy as jnp
from jax import lax
from jax.experimental import pallas as pl
from jax.experimental.pallas import tpu as pltpu


def _round_up(x, m):
    return ((x + m - 1) // m) * m


def _cdiv(a, b):
    return -(-a // b)


def _fold_lanes(x):
    """(C, k*128) -> (C, 128): sum 128-lane column blocks (aligned VPU adds)."""
    k = x.shape[1] // 128
    acc = x[:, 0:128]
    for j in range(1, k):
        acc = acc + x[:, j * 128:(j + 1) * 128]
    return acc


def _chunk_partials(x, tgt, class_ids, valid_lanes, apply_softmax):
    """Partial dice sums for one (C, chunk) lane chunk held in vregs.

    x:   (C, chunk) f32 scores/logits
    tgt: (1, chunk) int32 labels
    valid_lanes: static number of in-bounds lanes (== chunk on the hot path).
    Returns three (C, 128) partial accumulators: (inter, score^2, onehot).
    """
    c, chunk = x.shape
    masked = valid_lanes < chunk
    if masked:
        lane = lax.broadcasted_iota(jnp.int32, (1, chunk), 1)
        vmask = lane < valid_lanes            # static bound -> cheap const mask
        # Replace possibly-garbage (even non-finite) OOB lanes BEFORE exp.
        x = jnp.where(vmask, x, 0.0)

    if apply_softmax:
        m = jnp.max(x, axis=0, keepdims=True)
        e = jnp.exp(x - m)
        inv = 1.0 / jnp.sum(e, axis=0, keepdims=True)   # T recips, not C*T divs
        s = e * inv
    else:
        s = x

    oh = tgt == class_ids                     # (C, chunk) bool one-hot
    if masked:
        oh = jnp.logical_and(oh, vmask)

    inter = jnp.where(oh, s, 0.0)             # score * onehot without a mul
    sq = s * s
    if masked:
        sq = jnp.where(vmask, sq, 0.0)        # softmax output != 0 on OOB lanes

    return (_fold_lanes(inter), _fold_lanes(sq),
            _fold_lanes(oh.astype(jnp.float32)))


def _dice_partial_kernel(score_ref, tgt_ref, out_ref, *, chunk, rem,
                         apply_softmax):
    # Grid: (N, ceil(HW / tile)); axis 1 is the innermost reduction axis.
    t = pl.program_id(1)
    nt = pl.num_programs(1)
    c, tile = score_ref.shape

    @pl.when(t == 0)
    def _init():
        out_ref[...] = jnp.zeros_like(out_ref)

    # Hoisted once per grid step (small: C x chunk int32), reused by all chunks.
    class_ids = lax.broadcasted_iota(jnp.int32, (c, chunk), 0)

    def run(n_lanes):
        # n_lanes is static -> fully static slicing & masking decisions.
        acc_i = jnp.zeros((c, 128), jnp.float32)
        acc_s = jnp.zeros((c, 128), jnp.float32)
        acc_o = jnp.zeros((c, 128), jnp.float32)
        n_ch = _cdiv(n_lanes, chunk)
        for j in range(n_ch):
            lo = j * chunk
            vl = min(chunk, n_lanes - lo)
            x = score_ref[:, lo:lo + chunk].astype(jnp.float32)
            tg = tgt_ref[:, lo:lo + chunk]
            pi, ps, po = _chunk_partials(x, tg, class_ids, vl, apply_softmax)
            acc_i = acc_i + pi
            acc_s = acc_s + ps
            acc_o = acc_o + po
        # Single touch of the resident VMEM output block per grid step.
        out_ref[0] += acc_i
        out_ref[1] += acc_s
        out_ref[2] += acc_o

    if rem == tile:
        run(tile)                             # every step full: no masks at all
    else:
        @pl.when(t < nt - 1)
        def _hot():
            run(tile)                         # hot path: full tile, no masking

        @pl.when(t == nt - 1)
        def _tail():
            run(rem)                          # cold path: only step with masks


def dice_loss(inputs, target, n_classes, weight=None, softmax=False,
              tile=None, max_chunks_per_step=32, vmem_budget_bytes=12 << 20):
    """inputs: [N, C, H, W] float scores, target: [N, H, W] class indices."""
    n, c, h, w_sp = inputs.shape
    assert c == n_classes
    if not jnp.issubdtype(inputs.dtype, jnp.floating):
        inputs = inputs.astype(jnp.float32)
    score_bytes = jnp.dtype(inputs.dtype).itemsize    # bf16 stays bf16 in HBM

    hw = h * w_sp
    score = inputs.reshape(n, c, hw)                  # free contiguous reshape
    tgt = target.astype(jnp.int32).reshape(n, 1, hw)

    hw128 = _round_up(hw, 128)
    # Chunk: keep the per-chunk (C, chunk) f32 working set to ~<= 8 vregs.
    chunk = max(128, min(1024, ((32768 // max(c, 1)) // 4) // 128 * 128))
    chunk = min(chunk, hw128)

    # Tile: as many chunks per grid step as the double-buffered VMEM budget
    # allows (intermediates no longer scale with tile thanks to chunking).
    if tile is None:
        per_lane = 2 * (c * score_bytes + 4)          # 2 bufs x (score + tgt)
        tile = min(int(vmem_budget_bytes // per_lane),
                   chunk * max_chunks_per_step)
    tile = int(tile)
    tile = max(chunk, (tile // chunk) * chunk)        # multiple of chunk (>=128)
    tile = min(tile, _round_up(hw, chunk))

    grid_t = _cdiv(hw, tile)
    rem = hw - (grid_t - 1) * tile                    # static ragged-tail size

    kernel = functools.partial(_dice_partial_kernel, chunk=int(chunk),
                               rem=int(rem), apply_softmax=bool(softmax))

    parts = pl.pallas_call(
        kernel,
        out_shape=jax.ShapeDtypeStruct((n, 3, c, 128), jnp.float32),
        grid_spec=pltpu.PrefetchScalarGridSpec(
            num_scalar_prefetch=0,
            grid=(n, grid_t),
            in_specs=[
                pl.BlockSpec((None, c, tile), lambda i, t: (i, 0, t)),   # scores
                pl.BlockSpec((None, 1, tile), lambda i, t: (i, 0, t)),   # target
            ],
            out_specs=pl.BlockSpec((None, 3, c, 128),
                                   lambda i, t: (i, 0, 0, 0)),
        ),
        compiler_params=pltpu.CompilerParams(
            dimension_semantics=("parallel", "arbitrary"),
            vmem_limit_bytes=32 << 20),
    )(score, tgt)

    # Tiny epilogue: cross-lane/batch reduce + dice + weighting + mean.
    sums = jnp.sum(parts, axis=(0, 3))                # (3, C)
    intersect, z_sum, y_sum = sums[0], sums[1], sums[2]
    smooth = 1e-5
    dice = 1.0 - (2.0 * intersect + smooth) / (z_sum + y_sum + smooth)
    if weight is None:
        w = jnp.ones((n_classes,), jnp.float32)
    else:
        w = jnp.asarray(weight, jnp.float32).reshape(n_classes)
    return jnp.sum(dice * w) / n_classes


def dice_loss_ref(inputs, target, n_classes, weight=None, softmax=False):
    """Pure-JAX reference mirroring the PyTorch DiceLoss.forward."""
    if softmax:
        inputs = jax.nn.softmax(inputs, axis=1)
    inputs = inputs.astype(jnp.float32)
    target_oh = jax.nn.one_hot(target.astype(jnp.int32), n_classes,
                               axis=1, dtype=jnp.float32)
    if weight is None:
        weight = [1.0] * n_classes
    smooth = 1e-5
    loss = 0.0
    for i in range(n_classes):
        s = inputs[:, i]
        t = target_oh[:, i]
        intersect = jnp.sum(s * t)
        y_sum = jnp.sum(t * t)
        z_sum = jnp.sum(s * s)
        dice = 1.0 - (2.0 * intersect + smooth) / (z_sum + y_sum + smooth)
        loss = loss + dice * weight[i]
    return loss / n_classes


if __name__ == "__main__":
    key = jax.random.PRNGKey(0)

    # Test 1: softmax=True, uniform weights, 128-aligned spatial size
    # (single full tile, hot path only).
    N, C, H, W = 2, 4, 16, 16
    k1, k2 = jax.random.split(key)
    inputs = jax.random.normal(k1, (N, C, H, W), dtype=jnp.float32)
    target = jax.random.randint(k2, (N, H, W), 0, C, dtype=jnp.int32)

    out = dice_loss(inputs, target, n_classes=C, softmax=True)
    out = jax.block_until_ready(out)
    ref = dice_loss_ref(inputs, target, n_classes=C, softmax=True)
    assert jnp.allclose(out, ref, rtol=1e-4, atol=1e-5), (out, ref)

    # Test 2: softmax=False, custom class weights, non-128-multiple spatial
    # size (exercises the no-pad ragged tail + in-kernel lane masking path).
    N2, C2, H2, W2 = 2, 4, 10, 10
    k3, k4 = jax.random.split(k2)
    inputs2 = jax.random.normal(k3, (N2, C2, H2, W2), dtype=jnp.float32)
    target2 = jax.random.randint(k4, (N2, H2, W2), 0, C2, dtype=jnp.int32)
    wts = [1.0, 2.0, 0.5, 1.5]

    out2 = dice_loss(inputs2, target2, n_classes=C2, weight=wts, softmax=False)
    out2 = jax.block_until_ready(out2)
    ref2 = dice_loss_ref(inputs2, target2, n_classes=C2, weight=wts,
                         softmax=False)
    assert jnp.allclose(out2, ref2, rtol=1e-4, atol=1e-5), (out2, ref2)

    # Test 3: multi-step reduction with an explicit small tile so both the
    # multi-chunk hot path and the masked cold tail run in one call.
    N3, C3, H3, W3 = 1, 3, 48, 48
    k5, k6 = jax.random.split(k4)
    inputs3 = jax.random.normal(k5, (N3, C3, H3, W3), dtype=jnp.float32)
    target3 = jax.random.randint(k6, (N3, H3, W3), 0, C3, dtype=jnp.int32)

    out3 = dice_loss(inputs3, target3, n_classes=C3, softmax=True, tile=2048)
    out3 = jax.block_until_ready(out3)
    ref3 = dice_loss_ref(inputs3, target3, n_classes=C3, softmax=True)
    assert jnp.allclose(out3, ref3, rtol=1e-4, atol=1e-5), (out3, ref3)

    print("KERNEL_OK")
</pallas_src>

<mosaic_0001>
module attributes {stable_mosaic.version = 11 : i64} {
  func.func @_dice_partial_kernel(%arg0: i32, %arg1: i32, %arg2: memref<1x4x256xf32, #tpu.memory_space<vmem>>, %arg3: memref<1x1x256xi32, #tpu.memory_space<vmem>>, %arg4: memref<1x3x4x128xf32, #tpu.memory_space<vmem>>) attributes {dimension_semantics = [#tpu.dimension_semantics<parallel>, #tpu.dimension_semantics<arbitrary>], iteration_bounds = array<i64: 2, 1>, scalar_prefetch = 0 : i64, scratch_operands = 0 : i64, tpu.core_type = #tpu.core_type<tc>, window_params = [{transform_indices = @transform_0, window_bounds = array<i64: 1, 4, 256>}, {transform_indices = @transform_1, window_bounds = array<i64: 1, 1, 256>}, {transform_indices = @transform_2, window_bounds = array<i64: 1, 3, 4, 128>}]} {
    %c0_i32 = arith.constant 0 : i32
    %0 = arith.cmpi eq, %arg1, %c0_i32 : i32
    %1 = arith.extui %0 : i1 to i32
    %c0_i32_0 = arith.constant 0 : i32
    %2 = arith.cmpi ne, %1, %c0_i32_0 : i32
    scf.if %2 {
      %cst_34 = arith.constant 0.000000e+00 : f32
      %59 = vector.broadcast %cst_34 : f32 to vector<3x4x128xf32>
      %c0_35 = arith.constant 0 : index
      %c0_36 = arith.constant 0 : index
      %c0_37 = arith.constant 0 : index
      %c0_38 = arith.constant 0 : index
      %60 = vector.load %arg4[%c0_35, %c0_36, %c0_37, %c0_38] : memref<1x3x4x128xf32, #tpu.memory_space<vmem>>, vector<1x3x4x128xf32>
      %61 = vector.shape_cast %60 : vector<1x3x4x128xf32> to vector<3x4x128xf32>
      %62 = vector.shape_cast %59 : vector<3x4x128xf32> to vector<1x3x4x128xf32>
      tpu.vector_store %arg4[%c0_35, %c0_36, %c0_37, %c0_38], %62 {strides = array<i32>} : memref<1x3x4x128xf32, #tpu.memory_space<vmem>>, vector<1x3x4x128xf32>,
    } else {
    }
    %3 = tpu.iota {dimensions = array<i32: 0>} : vector<4x256xi32>
    %cst = arith.constant 0.000000e+00 : f32
    %4 = vector.broadcast %cst : f32 to vector<4x128xf32>
    %cst_1 = arith.constant 0.000000e+00 : f32
    %5 = vector.broadcast %cst_1 : f32 to vector<4x128xf32>
    %cst_2 = arith.constant 0.000000e+00 : f32
    %6 = vector.broadcast %cst_2 : f32 to vector<4x128xf32>
    %c0 = arith.constant 0 : index
    %c0_3 = arith.constant 0 : index
    %c0_4 = arith.constant 0 : index
    %7 = vector.load %arg2[%c0, %c0_3, %c0_4] : memref<1x4x256xf32, #tpu.memory_space<vmem>>, vector<1x4x256xf32>
    %8 = vector.shape_cast %7 : vector<1x4x256xf32> to vector<4x256xf32>
    %c0_5 = arith.constant 0 : index
    %c0_6 = arith.constant 0 : index
    %c0_7 = arith.constant 0 : index
    %9 = vector.load %arg3[%c0_5, %c0_6, %c0_7] : memref<1x1x256xi32, #tpu.memory_space<vmem>>, vector<1x1x256xi32>
    %10 = vector.shape_cast %9 : vector<1x1x256xi32> to vector<1x256xi32>
    %cst_8 = arith.constant dense<0xFF800000> : vector<256xf32>
    %11 = vector.multi_reduction <maximumf>, %8, %cst_8 [0] : vector<4x256xf32> to vector<256xf32>
    %12 = vector.shape_cast %11 : vector<256xf32> to vector<1x256xf32>
    %13 = vector.broadcast %12 : vector<1x256xf32> to vector<4x256xf32>
    %14 = arith.subf %8, %13 : vector<4x256xf32>
    %15 = math.exp %14 : vector<4x256xf32>
    %cst_9 = arith.constant dense<0.000000e+00> : vector<256xf32>
    %16 = vector.multi_reduction <add>, %15, %cst_9 [0] : vector<4x256xf32> to vector<256xf32>
    %17 = vector.shape_cast %16 : vector<256xf32> to vector<1x256xf32>
    %cst_10 = arith.constant 1.000000e+00 : f32
    %18 = vector.broadcast %cst_10 : f32 to vector<1x256xf32>
    %19 = arith.divf %18, %17 : vector<1x256xf32>
    %20 = vector.broadcast %19 : vector<1x256xf32> to vector<4x256xf32>
    %21 = arith.mulf %15, %20 : vector<4x256xf32>
    %22 = vector.broadcast %10 : vector<1x256xi32> to vector<4x256xi32>
    %23 = arith.cmpi eq, %22, %3 : vector<4x256xi32>
    %cst_11 = arith.constant 0.000000e+00 : f32
    %24 = vector.broadcast %cst_11 : f32 to vector<4x256xf32>
    %25 = arith.select %23, %21, %24 : vector<4x256xi1>, vector<4x256xf32>
    %26 = arith.mulf %21, %21 : vector<4x256xf32>
    %27 = vector.extract_strided_slice %25 {offsets = [0, 0], sizes = [4, 128], strides = [1, 1]} : vector<4x256xf32> to vector<4x128xf32>
    %28 = vector.extract_strided_slice %25 {offsets = [0, 128], sizes = [4, 128], strides = [1, 1]} : vector<4x256xf32> to vector<4x128xf32>
    %29 = arith.addf %27, %28 : vector<4x128xf32>
    %30 = vector.extract_strided_slice %26 {offsets = [0, 0], sizes = [4, 128], strides = [1, 1]} : vector<4x256xf32> to vector<4x128xf32>
    %31 = vector.extract_strided_slice %26 {offsets = [0, 128], sizes = [4, 128], strides = [1, 1]} : vector<4x256xf32> to vector<4x128xf32>
    %32 = arith.addf %30, %31 : vector<4x128xf32>
    %33 = arith.extui %23 : vector<4x256xi1> to vector<4x256xi32>
    %34 = arith.sitofp %33 : vector<4x256xi32> to vector<4x256xf32>
    %35 = vector.extract_strided_slice %34 {offsets = [0, 0], sizes = [4, 128], strides = [1, 1]} : vector<4x256xf32> to vector<4x128xf32>
    %36 = vector.extract_strided_slice %34 {offsets = [0, 128], sizes = [4, 128], strides = [1, 1]} : vector<4x256xf32> to vector<4x128xf32>
    %37 = arith.addf %35, %36 : vector<4x128xf32>
    %38 = arith.addf %4, %29 : vector<4x128xf32>
    %39 = arith.addf %5, %32 : vector<4x128xf32>
    %40 = arith.addf %6, %37 : vector<4x128xf32>
    %c0_12 = arith.constant 0 : index
    %c0_13 = arith.constant 0 : index
    %c0_14 = arith.constant 0 : index
    %c0_15 = arith.constant 0 : index
    %41 = vector.load %arg4[%c0_12, %c0_13, %c0_14, %c0_15] : memref<1x3x4x128xf32, #tpu.memory_space<vmem>>, vector<1x1x4x128xf32>
    %42 = vector.shape_cast %41 : vector<1x1x4x128xf32> to vector<4x128xf32>
    %43 = arith.addf %42, %38 : vector<4x128xf32>
    %c0_16 = arith.constant 0 : index
    %c0_17 = arith.constant 0 : index
    %c0_18 = arith.constant 0 : index
    %c0_19 = arith.constant 0 : index
    %44 = vector.load %arg4[%c0_16, %c0_17, %c0_18, %c0_19] : memref<1x3x4x128xf32, #tpu.memory_space<vmem>>, vector<1x1x4x128xf32>
    %45 = vector.shape_cast %44 : vector<1x1x4x128xf32> to vector<4x128xf32>
    %46 = vector.shape_cast %43 : vector<4x128xf32> to vector<1x1x4x128xf32>
    tpu.vector_store %arg4[%c0_16, %c0_17, %c0_18, %c0_19], %46 {strides = array<i32>} : memref<1x3x4x128xf32, #tpu.memory_space<vmem>>, vector<1x1x4x128xf32>,
    %c0_20 = arith.constant 0 : index
    %c1 = arith.constant 1 : index
    %c0_21 = arith.constant 0 : index
    %c0_22 = arith.constant 0 : index
    %47 = vector.load %arg4[%c0_20, %c1, %c0_21, %c0_22] : memref<1x3x4x128xf32, #tpu.memory_space<vmem>>, vector<1x1x4x128xf32>
    %48 = vector.shape_cast %47 : vector<1x1x4x128xf32> to vector<4x128xf32>
    %49 = arith.addf %48, %39 : vector<4x128xf32>
    %c0_23 = arith.constant 0 : index
    %c1_24 = arith.constant 1 : index
    %c0_25 = arith.constant 0 : index
    %c0_26 = arith.constant 0 : index
    %50 = vector.load %arg4[%c0_23, %c1_24, %c0_25, %c0_26] : memref<1x3x4x128xf32, #tpu.memory_space<vmem>>, vector<1x1x4x128xf32>
    %51 = vector.shape_cast %50 : vector<1x1x4x128xf32> to vector<4x128xf32>
    %52 = vector.shape_cast %49 : vector<4x128xf32> to vector<1x1x4x128xf32>
    tpu.vector_store %arg4[%c0_23, %c1_24, %c0_25, %c0_26], %52 {strides = array<i32>} : memref<1x3x4x128xf32, #tpu.memory_space<vmem>>, vector<1x1x4x128xf32>,
    %c0_27 = arith.constant 0 : index
    %c2 = arith.constant 2 : index
    %c0_28 = arith.constant 0 : index
    %c0_29 = arith.constant 0 : index
    %53 = vector.load %arg4[%c0_27, %c2, %c0_28, %c0_29] : memref<1x3x4x128xf32, #tpu.memory_space<vmem>>, vector<1x1x4x128xf32>
    %54 = vector.shape_cast %53 : vector<1x1x4x128xf32> to vector<4x128xf32>
    %55 = arith.addf %54, %40 : vector<4x128xf32>
    %c0_30 = arith.constant 0 : index
    %c2_31 = arith.constant 2 : index
    %c0_32 = arith.constant 0 : index
    %c0_33 = arith.constant 0 : index
    %56 = vector.load %arg4[%c0_30, %c2_31, %c0_32, %c0_33] : memref<1x3x4x128xf32, #tpu.memory_space<vmem>>, vector<1x1x4x128xf32>
    %57 = vector.shape_cast %56 : vector<1x1x4x128xf32> to vector<4x128xf32>
    %58 = vector.shape_cast %55 : vector<4x128xf32> to vector<1x1x4x128xf32>
    tpu.vector_store %arg4[%c0_30, %c2_31, %c0_32, %c0_33], %58 {strides = array<i32>} : memref<1x3x4x128xf32, #tpu.memory_space<vmem>>, vector<1x1x4x128xf32>,
    return
  }
  func.func @transform_0(%arg0: i32, %arg1: i32) -> (i32, i32, i32) {
    %c0_i32 = arith.constant 0 : i32
    %c0_i32_0 = arith.constant 0 : i32
    return %arg0, %c0_i32, %arg1 : i32, i32, i32
  }
  func.func @transform_1(%arg0: i32, %arg1: i32) -> (i32, i32, i32) {
    %c0_i32 = arith.constant 0 : i32
    %c0_i32_0 = arith.constant 0 : i32
    return %arg0, %c0_i32, %arg1 : i32, i32, i32
  }
  func.func @transform_2(%arg0: i32, %arg1: i32) -> (i32, i32, i32, i32) {
    %c0_i32 = arith.constant 0 : i32
    %c0_i32_0 = arith.constant 0 : i32
    %c0_i32_1 = arith.constant 0 : i32
    %c0_i32_2 = arith.constant 0 : i32
    return %arg0, %c0_i32, %c0_i32_0, %c0_i32_1 : i32, i32, i32, i32
  }
}

</mosaic_0001>

<llo_original>
// kernel: tpu_custom_call.1
$region0: #{tpu_custom_call.1}
  #allocation0 [shape = 'u32[]', space=smem, size = 0x4, offset = 0x4, fixed_abs, tag = 'smem constant byte address 0x4 - core index']
  #allocation1 [shape = 'u32[144,128]{1,0:T(1,128)}', space=vmem, size = 0x12000, scoped, tag = 'internal scratch']
  %s0 = inlined_call_operand.hbm [shape: f32[2,4,256], index: 0, kind: input, shape index: {}]
  %s1 = inlined_call_operand.hbm [shape: s32[2,1,256], index: 1, kind: input, shape index: {}]
  %s2 = inlined_call_operand.hbm [shape: f32[2,3,4,128], index: 2, kind: output, shape index: {}]
  %s3 = sld [smem:[#allocation0]]
  $region53: #{tpu_custom_call.1} parent=0
    _
  %s5 = ssub.s32 1, %s3
  %s6 = scalar_select 0, %s5, %s3
  $region1: #{tpu_custom_call.1} parent=0
    #allocation2 [shape = 'u8[8192]{0}', space=vmem, size = 0x2000, scoped, tag = 'input window, operand 0']
    #allocation3 [shape = 's32[2]{0}', space=sflag, size = 0x8, scoped, tag = 'scoped memory for tpu_custom_call.1']
    #allocation4 [shape = 's32[2]{0}', space=sflag, size = 0x8, scoped, tag = 'scoped memory for tpu_custom_call.1']
    #allocation5 [shape = 'u8[2048]{0}', space=vmem, size = 0x800, scoped, tag = 'input window, operand 1']
    #allocation6 [shape = 's32[2]{0}', space=sflag, size = 0x8, scoped, tag = 'scoped memory for tpu_custom_call.1']
    #allocation7 [shape = 'u8[12288]{0}', space=vmem, size = 0x3000, scoped, tag = 'output window, operand 0']
    %7 = vsyncpa [#allocation3], 0
    %s8 = scalar_lea.sflag [#allocation3], 1
    %9 = vsyncpa %s8, 0
    %10 = vsyncpa [#allocation6], 0
    %s11 = scalar_lea.sflag [#allocation6], 1
    %12 = vsyncpa %s11, 0
    %13 = vsyncpa [#allocation4], 0
    %s14 = scalar_lea.sflag [#allocation4], 1
    %15 = vsyncpa %s14, 0
    loop: start=0, step=1, limit=4
    $region2: #{tpu_custom_call.1} parent=1 // loop_pre_header
      _
    $region3: #{tpu_custom_call.1} parent=1 // loop_header
      %s17 = sphi 0, %s21
      %p18 = scmp.ge.s32.totalorder %s17, 4
      %s24 = sphi 0, %s36
      %s25 = sphi 0, %s32
      %s26 = sphi 0, %s24
      %s27 = sphi 0, %s25
      %s28 = sphi 0, %s26
      %s29 = sphi 0, %s27
      %s41 = sphi 0, %s43
      %s44 = sphi 0, %s41
      %s45 = sphi 0, %s44
      %s61 = sphi 0, %s45
      %s69 = sphi 0, %s71
      %s72 = sphi 0, %s69
      %s73 = sphi 0, %s72
      %s89 = sphi 0, %s73
      %s95 = sphi 0, %s97
      %s98 = sphi 0, %s95
      %s99 = sphi 0, %s98
      %s115 = sphi 0, %s99
    $region4: #{tpu_custom_call.1} parent=1 // loop_header_branch
      %20 = sbr.rel (%p18) target = $region8
    $region5: #{tpu_custom_call.1} parent=1 // loop_body
      %s22 = ssub.s32 %s17, 1
      %s23 = ssub.s32 %s17, 2
      %s30 = sadd.s32 1, %s25
      %p31 = scmp.ge.s32.totalorder %s30, 1
      %s32 = scalar_select %p31, 0, %s30
      %s33 = sadd.s32 1, %s24
      %s34 = scalar_select %p31, %s33, %s24
      %p35 = scmp.ge.s32.totalorder %s34, 2
      %s36 = scalar_select %p35, 0, %s34
      %s37 = ssub.s32 %s24, %s36
      %s38 = ssub.s32 %s25, %s32
      %s39 = sor.u32 %s37, %s38
      %p40 = scmp.eq.s32.totalorder %s39, 0
      %s42 = sadd.s32 %s41, 1
      %s43 = scalar_select %p40, %s41, %s42
      %p46 = pneg %p40
      %p47 = scmp.eq.s32.totalorder %s17, 1
      %p48 = por %p46, %p47
      %p49 = scmp.ne.s32.totalorder %s41, %s44
      %p50 = scmp.eq.s32.totalorder %s17, 0
      %p51 = por %p49, %p50
      %p52 = scmp.ne.s32.totalorder %s41, %s44
      %p53 = scmp.eq.s32.totalorder %s22, 1
      %p54 = por %p52, %p53
      %p55 = scmp.ne.s32.totalorder %s44, %s45
      %p56 = scmp.eq.s32.totalorder %s22, 0
      %p57 = por %p55, %p56
      %p58 = scmp.ne.s32.totalorder %s44, %s45
      %p59 = scmp.eq.s32.totalorder %s23, 1
      %p60 = por %p58, %p59
      %p62 = scmp.ne.s32.totalorder %s45, %s61
      %p63 = scmp.eq.s32.totalorder %s23, 0
      %p64 = por %p62, %p63
      %s65 = ssub.s32 %s24, %s36
      %s66 = ssub.s32 %s25, %s32
      %s67 = sor.u32 %s65, %s66
      %p68 = scmp.eq.s32.totalorder %s67, 0
      %s70 = sadd.s32 %s69, 1
      %s71 = scalar_select %p68, %s69, %s70
      %p74 = pneg %p68
      %p75 = scmp.eq.s32.totalorder %s17, 1
      %p76 = por %p74, %p75
      %p77 = scmp.ne.s32.totalorder %s69, %s72
      %p78 = scmp.eq.s32.totalorder %s17, 0
      %p79 = por %p77, %p78
      %p80 = scmp.ne.s32.totalorder %s69, %s72
      %p81 = scmp.eq.s32.totalorder %s22, 1
      %p82 = por %p80, %p81
      %p83 = scmp.ne.s32.totalorder %s72, %s73
      %p84 = scmp.eq.s32.totalorder %s22, 0
      %p85 = por %p83, %p84
      %p86 = scmp.ne.s32.totalorder %s72, %s73
      %p87 = scmp.eq.s32.totalorder %s23, 1
      %p88 = por %p86, %p87
      %p90 = scmp.ne.s32.totalorder %s73, %s89
      %p91 = scmp.eq.s32.totalorder %s23, 0
      %p92 = por %p90, %p91
      %s93 = ssub.s32 %s24, %s36
      %p94 = scmp.eq.s32.totalorder %s93, 0
      %s96 = sadd.s32 %s95, 1
      %s97 = scalar_select %p94, %s95, %s96
      %p100 = pneg %p94
      %p101 = scmp.eq.s32.totalorder %s17, 1
      %p102 = por %p100, %p101
      %p103 = scmp.ne.s32.totalorder %s95, %s98
      %p104 = scmp.eq.s32.totalorder %s17, 0
      %p105 = por %p103, %p104
      %p106 = scmp.ne.s32.totalorder %s95, %s98
      %p107 = scmp.eq.s32.totalorder %s22, 1
      %p108 = por %p106, %p107
      %p109 = scmp.ne.s32.totalorder %s98, %s99
      %p110 = scmp.eq.s32.totalorder %s22, 0
      %p111 = por %p109, %p110
      %p112 = scmp.ne.s32.totalorder %s98, %s99
      %p113 = scmp.eq.s32.totalorder %s23, 1
      %p114 = por %p112, %p113
      %p116 = scmp.ne.s32.totalorder %s99, %s115
      %p117 = scmp.eq.s32.totalorder %s23, 0
      %p118 = por %p116, %p117
      %p119 = scmp.le.s32.totalorder 1, %s17
      %p120 = scmp.lt.s32.totalorder %s17, 3
      %p121 = pnand %p119, %p120
      %p122 = pneg %p121
      // Predicated region
      $region9: #{tpu_custom_call.1} parent=5 // pred_check
        _
      $region10: #{tpu_custom_call.1} parent=5 // pred_check_branch
        %124 = sbr.rel (%p121) target = $region12
      $region11: #{tpu_custom_call.1} parent=5 // pred_region
        %s125 = ssub.s32 %s17, 1
      $region12: #{tpu_custom_call.1} parent=5 // pred_fallthru
        _
      %p126 = scmp.lt.s32.totalorder %s17, 2
      // Predicated region
      $region13: #{tpu_custom_call.1} parent=5 // pred_check
        %p127 = pneg %p126
      $region14: #{tpu_custom_call.1} parent=5 // pred_check_branch
        %129 = sbr.rel (%p127) target = $region16
      $region15: #{tpu_custom_call.1} parent=5 // pred_region
        // Predicated region
        $region17: #{tpu_custom_call.1} parent=15 // pred_check
          %p130 = pneg %p51
        $region18: #{tpu_custom_call.1} parent=15 // pred_check_branch
          %132 = sbr.rel (%p130) target = $region20
        $region19: #{tpu_custom_call.1} parent=15 // pred_region
          %s133 = sand.u32 %s41, 1
          %s134 = scalar_lea.sflag [#allocation3], %s133
          %s135 = sand.u32 %s41, 1
          %s136 = smul.addr %s135, 8
          %s137 = scalar_lea.vmem [#allocation2], %s136
          %s138 = smul.u32 2, %s25
          %s140 = ssub.s32 128, 128
          %141 = vsyncadd %s134, %s140
          %s142 = smul.addr %s24, 2
          %s143 = sadd.s32 %s138, %s142
          %s144 = smul.addr %s143, 64
          %s145 = scalar_lea.hbm %s0, %s144
          %s147 = sshll.u32 %s137, 4
          %s148 = int_to_ptr.vmem [resolvable:$true] %s147
          %150 = dma.hbm_to_vmem [thread:$0]  %s145, 128, %s148, %s134
        $region20: #{tpu_custom_call.1} parent=15 // pred_fallthru
          _
        // Predicated region
        $region21: #{tpu_custom_call.1} parent=15 // pred_check
          %p151 = pneg %p79
        $region22: #{tpu_custom_call.1} parent=15 // pred_check_branch
          %153 = sbr.rel (%p151) target = $region24
        $region23: #{tpu_custom_call.1} parent=15 // pred_region
          %s154 = sand.u32 %s69, 1
          %s155 = scalar_lea.sflag [#allocation6], %s154
          %s156 = sand.u32 %s69, 1
          %s157 = smul.addr %s156, 2
          %s158 = scalar_lea.vmem [#allocation5], %s157
          %s159 = smul.u32 2, %s25
          %s161 = ssub.s32 32, 32
          %162 = vsyncadd %s155, %s161
          %s163 = smul.addr %s24, 2
          %s164 = sadd.s32 %s159, %s163
          %s165 = smul.addr %s164, 16
          %s166 = scalar_lea.hbm %s1, %s165
          %s168 = sshll.u32 %s158, 4
          %s169 = int_to_ptr.vmem [resolvable:$true] %s168
          %171 = dma.hbm_to_vmem [thread:$0]  %s166, 32, %s169, %s155
        $region24: #{tpu_custom_call.1} parent=15 // pred_fallthru
          _
      $region16: #{tpu_custom_call.1} parent=5 // pred_fallthru
        _
      %p172 = scmp.le.s32.totalorder 1, %s17
      %p173 = scmp.lt.s32.totalorder %s17, 3
      %p174 = pnand %p172, %p173
      %p175 = pneg %p174
      // Predicated region
      $region25: #{tpu_custom_call.1} parent=5 // pred_check
        _
      $region26: #{tpu_custom_call.1} parent=5 // pred_check_branch
        %177 = sbr.rel (%p174) target = $region28
      $region27: #{tpu_custom_call.1} parent=5 // pred_region
        %s178 = ssub.s32 %s17, 1
        %s179 = sand.u32 %s44, 1
        %s180 = scalar_lea.sflag [#allocation3], %s179
        %s181 = sand.u32 %s44, 1
        %s182 = smul.addr %s181, 8
        %s183 = scalar_lea.vmem [#allocation2], %s182
        // Predicated region
        $region29: #{tpu_custom_call.1} parent=27 // pred_check
          %p184 = pneg %p57
        $region30: #{tpu_custom_call.1} parent=27 // pred_check_branch
          %186 = sbr.rel (%p184) target = $region32
        $region31: #{tpu_custom_call.1} parent=27 // pred_region
          %187 = dma.done %s180, 128
        $region32: #{tpu_custom_call.1} parent=27 // pred_fallthru
          _
        %s188 = sand.u32 %s72, 1
        %s189 = scalar_lea.sflag [#allocation6], %s188
        %s190 = sand.u32 %s72, 1
        %s191 = smul.addr %s190, 2
        %s192 = scalar_lea.vmem [#allocation5], %s191
        // Predicated region
        $region33: #{tpu_custom_call.1} parent=27 // pred_check
          %p193 = pneg %p85
        $region34: #{tpu_custom_call.1} parent=27 // pred_check_branch
          %195 = sbr.rel (%p193) target = $region36
        $region35: #{tpu_custom_call.1} parent=27 // pred_region
          %196 = dma.done %s189, 32
        $region36: #{tpu_custom_call.1} parent=27 // pred_fallthru
          _
        %s197 = sand.u32 %s44, 1
        %s198 = scalar_lea.sflag [#allocation3], %s197
        %s199 = sand.u32 %s44, 1
        %s200 = smul.addr %s199, 8
        %s201 = scalar_lea.vmem [#allocation2], %s200
        %p202 = pneg %p57
        %p203 = pneg %p54
        %s204 = sand.u32 %s72, 1
        %s205 = scalar_lea.sflag [#allocation6], %s204
        %s206 = sand.u32 %s72, 1
        %s207 = smul.addr %s206, 2
        %s208 = scalar_lea.vmem [#allocation5], %s207
        %p209 = pneg %p85
        %p210 = pneg %p82
        %p211 = pneg %p111
        %p212 = pneg %p108
        %s213 = sand.u32 %s98, 1
        %s214 = scalar_lea.sflag [#allocation4], %s213
        %s215 = sand.u32 %s98, 1
        %s216 = smul.addr %s215, 12
        %s217 = scalar_lea.vmem [#allocation7], %s216
        %s218 = smul.u32 2, %s27
        %s219 = smul.u32 2, %s27
        %p220 = scmp.eq.s32.totalorder %s27, 0
        // Predicated region
        $region37: #{tpu_custom_call.1} parent=27 // pred_check
          %p221 = pneg %p220
        $region38: #{tpu_custom_call.1} parent=27 // pred_check_branch
          %223 = sbr.rel (%p221) target = $region40
        $region39: #{tpu_custom_call.1} parent=27 // pred_region
          %224 = vst [vmem:[%s217] sm:$0xf] 0.0
          %225 = vst [vmem:[%s217 + $0x4] sm:$0xf] 0.0
          %226 = vst [vmem:[%s217 + $0x8] sm:$0xf] 0.0
        $region40: #{tpu_custom_call.1} parent=27 // pred_fallthru
          _
        %v227 = vlaneseq
        %v228 = vshrl.u32 %v227, 7
        %v229 = vld [vmem:[%s183] sm:$0xff]
        %v230 = vld [vmem:[%s192] sm:$0x3]
        %v232 = vcombine.high %v229, %v229
        %vm234 = vcmask 1043456
        %v235 = vsel %vm234, %v229, -inf
        %v236 = vrot.slane %v235, 4
        %v237 = vmax.f32 %v235, %v236
        %v238 = vrot.slane %v237, 2
        %v239 = vmax.f32 %v237, %v238
        %v240 = vrot.slane %v239, 1
        %v241 = vmax.f32 %v239, %v240
        %v242 = vsel %vm234, %v232, -inf
        %v243 = vrot.slane %v242, 4
        %v244 = vmax.f32 %v242, %v243
        %v245 = vrot.slane %v244, 2
        %v246 = vmax.f32 %v244, %v245
        %v247 = vrot.slane %v246, 1
        %v248 = vmax.f32 %v246, %v247
        %v251 = vcombine.low %v241, %v248
        %v253 = vsub.f32 %v229, %v251
        %v254 = vmul.f32 %v253, 1.442695
        %v255 = vpow.pop %v254
        %v257 = vcombine.high %v255, %v255
        %v259 = vsel %vm234, %v255, 0.0
        %v260 = vrot.slane %v259, 4
        %v261 = vadd.f32 %v259, %v260
        %v262 = vrot.slane %v261, 2
        %v263 = vadd.f32 %v261, %v262
        %v264 = vrot.slane %v263, 1
        %v265 = vadd.f32 %v263, %v264
        %v266 = vsel %vm234, %v257, 0.0
        %v267 = vrot.slane %v266, 4
        %v268 = vadd.f32 %v266, %v267
        %v269 = vrot.slane %v268, 2
        %v270 = vadd.f32 %v268, %v269
        %v271 = vrot.slane %v270, 1
        %v272 = vadd.f32 %v270, %v271
        %v273 = vrcp.pop %v265
        %v274 = vmul.f32 1.0, %v273
        %v275 = vrcp.pop %v272
        %v276 = vmul.f32 1.0, %v275
        %v279 = vcombine.low %v274, %v276
        %v281 = vmul.f32 %v255, %v279
        %v282 = vlaneseq
        %v283 = vshrl.u32 %v282, 7
        %v284 = vsub.s32 0, %v283
        %v285 = vrot.slane %v230, %v284
        %v286 = vlaneseq
        %v287 = vshrl.u32 %v286, 7
        %v288 = vsub.s32 1, %v287
        %v289 = vrot.slane %v230, %v288
        %vm290 = vcmp.eq.s32.totalorder %v285, %v228
        %vm291 = vcmp.eq.s32.totalorder %v289, %v228
        %v293 = vcombine.high %v281, %v281
        %v295 = vsel %vm290, %v281, 0.0
        %v296 = vsel %vm291, %v293, 0.0
        %v297 = vmul.f32 %v281, %v281
        %v298 = vadd.f32 %v295, %v296
        %v300 = vrot.slane %v297, 4
        %v302 = vadd.f32 %v297, %v300
        %v303 = vsel %vm290, 1, 0
        %v304 = vsel %vm291, 1, 0
        %v305 = vcvt.s32.f32 %v303
        %v306 = vcvt.s32.f32 %v304
        %v307 = vadd.f32 %v305, %v306
        %v308 = vadd.f32 %v298, 0.0
        %v309 = vadd.f32 %v302, 0.0
        %v310 = vadd.f32 %v307, 0.0
        %v311 = vld [vmem:[%s217] sm:$0xf]
        %v312 = vadd.f32 %v311, %v308
        %313 = vst [vmem:[%s217] sm:$0xf] %v312
        %s314 = scalar_lea.vmem %s217, 4 [#allocation7]
        %v315 = vld [vmem:[%s314] sm:$0xf]
        %v316 = vadd.f32 %v315, %v309
        %317 = vst [vmem:[%s314] sm:$0xf] %v316
        %s318 = scalar_lea.vmem %s217, 8 [#allocation7]
        %v319 = vld [vmem:[%s318] sm:$0xf]
        %v320 = vadd.f32 %v319, %v310
        %321 = vst [vmem:[%s318] sm:$0xf] %v320
        %s322 = sand.u32 %s98, 1
        %s323 = scalar_lea.sflag [#allocation4], %s322
        %s324 = sand.u32 %s98, 1
        %s325 = smul.addr %s324, 12
        %s326 = scalar_lea.vmem [#allocation7], %s325
        // Predicated region
        $region41: #{tpu_custom_call.1} parent=27 // pred_check
          %p327 = pneg %p108
        $region42: #{tpu_custom_call.1} parent=27 // pred_check_branch
          %329 = sbr.rel (%p327) target = $region44
        $region43: #{tpu_custom_call.1} parent=27 // pred_region
          %s331 = ssub.s32 192, 192
          %332 = vsyncadd %s323, %s331
          %s333 = smul.addr %s26, 3
          %s334 = smul.addr %s333, 64
          %s335 = scalar_lea.hbm %s2, %s334
          %s336 = sshll.u32 %s326, 4
          %s337 = int_to_ptr.vmem [resolvable:$true] %s336
          %342 = dma.vmem_to_hbm [thread:$0]  %s337, 192, %s335, %s323, 64, 64, 4
        $region44: #{tpu_custom_call.1} parent=27 // pred_fallthru
          _
      $region28: #{tpu_custom_call.1} parent=5 // pred_fallthru
        _
      %p343 = scmp.le.s32.totalorder 2, %s17
      // Predicated region
      $region45: #{tpu_custom_call.1} parent=5 // pred_check
        %p344 = pneg %p343
      $region46: #{tpu_custom_call.1} parent=5 // pred_check_branch
        %346 = sbr.rel (%p344) target = $region48
      $region47: #{tpu_custom_call.1} parent=5 // pred_region
        %s347 = ssub.s32 %s17, 2
        // Predicated region
        $region49: #{tpu_custom_call.1} parent=47 // pred_check
          %p348 = pneg %p114
        $region50: #{tpu_custom_call.1} parent=47 // pred_check_branch
          %350 = sbr.rel (%p348) target = $region52
        $region51: #{tpu_custom_call.1} parent=47 // pred_region
          %s351 = sand.u32 %s99, 1
          %s352 = scalar_lea.sflag [#allocation4], %s351
          %s353 = sand.u32 %s99, 1
          %s354 = smul.addr %s353, 12
          %s355 = scalar_lea.vmem [#allocation7], %s354
          %356 = dma.done %s352, 192
        $region52: #{tpu_custom_call.1} parent=47 // pred_fallthru
          _
      $region48: #{tpu_custom_call.1} parent=5 // pred_fallthru
        _
    $region6: #{tpu_custom_call.1} parent=1 // loop_footer
      %s21 = sadd.s32 1, %s17
    $region7: #{tpu_custom_call.1} parent=1 // loop_footer_branch
      %16 = sbr.rel target = $region3
    $region8: #{tpu_custom_call.1} parent=1 // loop_exit
      _
    %357 = vsyncpa [#allocation3], 1
    %s358 = scalar_lea.sflag [#allocation3], 1
    %359 = vsyncpa %s358, 1
    %360 = vsyncpa [#allocation6], 1
    %s361 = scalar_lea.sflag [#allocation6], 1
    %362 = vsyncpa %s361, 1
    %363 = vsyncpa [#allocation4], 1
    %s364 = scalar_lea.sflag [#allocation4], 1
    %365 = vsyncpa %s364, 1

</llo_original>
